<compile_context>
chip_gen: v5e
topology: v5e:2x2
jax: 0.10.0
libtpu: 0.0.40
codegen_flags: <defaults>
</compile_context>

<pallas_src>
import functools

import jax
import jax.numpy as jnp
from jax.experimental import pallas as pl
from jax.experimental.pallas import tpu as pltpu

H1, H2 = 300, 500            # hidden widths from the PyTorch module
H1_PAD, H2_PAD = 384, 512    # lane/MXU-friendly (multiples of 128)
MAX_TB = 1024                # max batch-tile rows per grid step


def _round_up(n, m):
    return ((n + m - 1) // m) * m


def _vmem_limit_bytes():
    """Generation-aware scoped-VMEM limit: ~3/4 of physical capacity
    (96 MiB on v5e/v6e's 128 MiB, 48 MiB on v7x's 64 MiB)."""
    cap = 128 * 1024 * 1024
    try:
        cap = pltpu.get_tpu_info().vmem_capacity_bytes
    except Exception:
        pass
    return int(min((cap * 3) // 4, 96 * 1024 * 1024))


def _activation_dtype():
    """bf16 bias-add + tanh on chips with a bf16 VPU/EUP path (v6e / v7x);
    f32 on v5e and older (no bf16 EUP) and on non-TPU backends."""
    try:
        kind = jax.devices()[0].device_kind.lower()
    except Exception:
        return jnp.float32
    if ("v6" in kind) or ("v7" in kind) or ("trillium" in kind):
        return jnp.bfloat16
    return jnp.float32


def _choose_batch_tile(B, d_pad, f_pad, vmem_budget):
    """Pick (TB, B_pad).

    * TB is a multiple of 16 (bf16 sublane packing), capped at MAX_TB and
      capped so double-buffered x/out tiles + activation temporaries +
      resident weights fit the scoped VMEM budget (matters on v7x).
    * For large B the tile count is kept even so the "parallel" batch axis
      shards across both v7x TensorCores.
    * Ragged B is split into ~equal tiles so padding waste stays small.
    """
    # Per-row VMEM bytes: double-buffered x tile (<= 4 B/elem), double-
    # buffered f32 out tile, f32 + bf16 activation temporaries.
    per_row = 2 * 4 * d_pad + 2 * 4 * f_pad + 6 * (H1_PAD + H2_PAD)
    # Resident (double-buffered) bf16 weights + f32 biases.
    static = 2 * (2 * (d_pad * H1_PAD + H1_PAD * H2_PAD + H2_PAD * f_pad)
                  + 4 * (H1_PAD + H2_PAD + f_pad))
    avail = vmem_budget - static - (2 << 20)          # 2 MiB slack
    tb_cap = max(16, min(MAX_TB, (avail // per_row) // 16 * 16))

    if B <= tb_cap:
        tb = _round_up(B, 16)
    else:
        nb = -(-B // tb_cap)          # ceil
        if nb & 1:
            nb += 1                   # even tile count -> both v7x TCs busy
        tb = min(tb_cap, _round_up(-(-B // nb), 16))
    return tb, _round_up(B, tb)


def mlp_kernel(x_ref, w1_ref, b1_ref, w2_ref, b2_ref, w3_ref, b3_ref, o_ref,
               *, act_dtype):
    # Cast x to the matmul dtype inside the kernel (no-op if already bf16);
    # saves a wrapper-side HBM pass over x when no padding is needed.
    x = x_ref[...].astype(w1_ref.dtype)

    # Layer 1: MXU matmul (f32 accumulate), bias add, tanh.
    a1 = jnp.dot(x, w1_ref[...], preferred_element_type=jnp.float32)
    z1 = jnp.tanh((a1 + b1_ref[...]).astype(act_dtype))

    # Layer 2.  (act_dtype == bf16 on v6e/v7x makes the astype below a no-op.)
    a2 = jnp.dot(z1.astype(w2_ref.dtype), w2_ref[...],
                 preferred_element_type=jnp.float32)
    z2 = jnp.tanh((a2 + b2_ref[...]).astype(act_dtype))

    # Layer 3 (no activation); lane-dense (multiple-of-128) output store.
    a3 = jnp.dot(z2.astype(w3_ref.dtype), w3_ref[...],
                 preferred_element_type=jnp.float32)
    o_ref[...] = (a3 + b3_ref[...]).astype(o_ref.dtype)


def prepare_params(params):
    """Pad + cast the six Linear parameters ONCE (do NOT call per forward).
    Returns ((padded arrays), (D, F))."""
    w1, b1, w2, b2, w3, b3 = params
    D, F = w1.shape[0], w3.shape[1]
    D_pad, F_pad = _round_up(D, 128), _round_up(F, 128)
    w1p = jnp.pad(w1, ((0, D_pad - D), (0, H1_PAD - H1))).astype(jnp.bfloat16)
    b1p = jnp.pad(b1, ((0, 0), (0, H1_PAD - H1))).astype(jnp.float32)
    w2p = jnp.pad(w2, ((0, H1_PAD - H1), (0, H2_PAD - H2))).astype(jnp.bfloat16)
    b2p = jnp.pad(b2, ((0, 0), (0, H2_PAD - H2))).astype(jnp.float32)
    w3p = jnp.pad(w3, ((0, H2_PAD - H2), (0, F_pad - F))).astype(jnp.bfloat16)
    b3p = jnp.pad(b3, ((0, 0), (0, F_pad - F))).astype(jnp.float32)
    return (w1p, b1p, w2p, b2p, w3p, b3p), (D, F)


def my_mlp_pallas(x, prepared):
    (w1p, b1p, w2p, b2p, w3p, b3p), (D, F) = prepared
    B = x.shape[0]
    assert x.shape[1] == D
    D_pad = w1p.shape[0]
    F_pad = w3p.shape[1]

    vmem_limit = _vmem_limit_bytes()
    TB, B_pad = _choose_batch_tile(B, D_pad, F_pad, vmem_limit)
    nb = B_pad // TB

    if B_pad != B or D_pad != D:
        # Pad + bf16-cast in one wrapper pass (padded zeros are inert).
        xp = jnp.pad(x, ((0, B_pad - B), (0, D_pad - D))).astype(jnp.bfloat16)
    else:
        # No padding needed -> no wrapper HBM pass; kernel casts on the VPU.
        xp = x

    act_dtype = _activation_dtype()

    flops = 2 * B_pad * (D_pad * H1_PAD + H1_PAD * H2_PAD + H2_PAD * F_pad)
    transcendentals = B_pad * (H1_PAD + H2_PAD)
    bytes_accessed = (
        xp.size * xp.dtype.itemsize
        + (w1p.size + w2p.size + w3p.size) * 2
        + (b1p.size + b2p.size + b3p.size) * 4
        + B_pad * F_pad * 4
    )

    out = pl.pallas_call(
        functools.partial(mlp_kernel, act_dtype=act_dtype),
        out_shape=jax.ShapeDtypeStruct((B_pad, F_pad), jnp.float32),
        grid_spec=pltpu.PrefetchScalarGridSpec(
            num_scalar_prefetch=0,
            grid=(nb,),
            in_specs=[
                # batch-tiled input
                pl.BlockSpec((TB, D_pad), lambda i: (i, 0)),
                # weights/biases: constant index_map -> fetched once and kept
                # VMEM-resident across all grid steps
                pl.BlockSpec((D_pad, H1_PAD), lambda i: (0, 0)),
                pl.BlockSpec((1, H1_PAD), lambda i: (0, 0)),
                pl.BlockSpec((H1_PAD, H2_PAD), lambda i: (0, 0)),
                pl.BlockSpec((1, H2_PAD), lambda i: (0, 0)),
                pl.BlockSpec((H2_PAD, F_pad), lambda i: (0, 0)),
                pl.BlockSpec((1, F_pad), lambda i: (0, 0)),
            ],
            out_specs=pl.BlockSpec((TB, F_pad), lambda i: (i, 0)),
        ),
        compiler_params=pltpu.CompilerParams(
            # Batch axis is embarrassingly parallel; for large B the tile
            # count is kept even so v7x's two TensorCores both get work.
            dimension_semantics=("parallel",),
            vmem_limit_bytes=vmem_limit,
        ),
        cost_estimate=pl.CostEstimate(
            flops=flops,
            transcendentals=transcendentals,
            bytes_accessed=bytes_accessed,
        ),
    )(xp, w1p, b1p, w2p, b2p, w3p, b3p)

    if B_pad == B and F_pad == F:
        return out                      # avoid an extra XLA slice/copy pass
    return out[:B, :F]


def init_params(key, D, F):
    """Deterministic init mimicking PyTorch nn.Linear defaults:
    uniform(-1/sqrt(fan_in), 1/sqrt(fan_in)) for weights and biases."""
    def linear(key, fan_in, fan_out):
        kw, kb = jax.random.split(key)
        bound = 1.0 / jnp.sqrt(fan_in)
        w = jax.random.uniform(kw, (fan_in, fan_out), jnp.float32, -bound, bound)
        b = jax.random.uniform(kb, (1, fan_out), jnp.float32, -bound, bound)
        return w, b

    k1, k2, k3 = jax.random.split(key, 3)
    w1, b1 = linear(k1, D, H1)
    w2, b2 = linear(k2, H1, H2)
    w3, b3 = linear(k3, H2, F)
    return (w1, b1, w2, b2, w3, b3)


def my_mlp_reference_f32(x, params):
    """Pure-f32 reference (matches the PyTorch module's math exactly)."""
    w1, b1, w2, b2, w3, b3 = params
    z1 = jnp.tanh(x @ w1 + b1)
    z2 = jnp.tanh(z1 @ w2 + b2)
    return z2 @ w3 + b3


def my_mlp_reference_mixed(x, params, act_dtype):
    """Reference with the kernel's exact precision choices (bf16 matmul
    inputs, f32 accumulate, act_dtype bias-add/tanh) to isolate Pallas
    correctness from intentional low-precision choices."""
    w1, b1, w2, b2, w3, b3 = params
    bf = jnp.bfloat16
    a1 = jnp.dot(x.astype(bf), w1.astype(bf),
                 preferred_element_type=jnp.float32) + b1
    z1 = jnp.tanh(a1.astype(act_dtype))
    a2 = jnp.dot(z1.astype(bf), w2.astype(bf),
                 preferred_element_type=jnp.float32) + b2
    z2 = jnp.tanh(a2.astype(act_dtype))
    return jnp.dot(z2.astype(bf), w3.astype(bf),
                   preferred_element_type=jnp.float32) + b3


if __name__ == "__main__":
    B, D, F = 8, 32, 16
    key = jax.random.PRNGKey(0)
    kx, kp = jax.random.split(key)

    x = jax.random.normal(kx, (B, D), jnp.float32)
    params = init_params(kp, D, F)
    prepared = prepare_params(params)        # pad/cast weights ONCE

    y = my_mlp_pallas(x, prepared)
    jax.block_until_ready(y)
    assert y.shape == (B, F)

    # Check against a reference that mirrors the kernel's precision choices.
    y_mixed = my_mlp_reference_mixed(x, params, _activation_dtype())
    assert jnp.allclose(y, y_mixed, atol=1e-2, rtol=1e-2), \
        "mismatch vs precision-matched reference"

    # Looser fidelity check against the full-f32 (PyTorch-equivalent) math.
    y_f32 = my_mlp_reference_f32(x, params)
    assert jnp.allclose(y, y_f32, atol=5e-2, rtol=5e-2), \
        "mismatch vs f32 reference"

    print("KERNEL_OK")
</pallas_src>

<mosaic_0001>
module attributes {stable_mosaic.version = 11 : i64} {
  func.func @mlp_kernel(%arg0: i32, %arg1: memref<16x128xbf16, #tpu.memory_space<vmem>>, %arg2: memref<128x384xbf16, #tpu.memory_space<vmem>>, %arg3: memref<1x384xf32, #tpu.memory_space<vmem>>, %arg4: memref<384x512xbf16, #tpu.memory_space<vmem>>, %arg5: memref<1x512xf32, #tpu.memory_space<vmem>>, %arg6: memref<512x128xbf16, #tpu.memory_space<vmem>>, %arg7: memref<1x128xf32, #tpu.memory_space<vmem>>, %arg8: memref<16x128xf32, #tpu.memory_space<vmem>>) attributes {dimension_semantics = [#tpu.dimension_semantics<parallel>], iteration_bounds = array<i64: 1>, scalar_prefetch = 0 : i64, scratch_operands = 0 : i64, tpu.core_type = #tpu.core_type<tc>, window_params = [{transform_indices = @transform_0, window_bounds = array<i64: 16, 128>}, {pipeline_mode = #tpu.pipeline_mode<synchronous>, transform_indices = @transform_1, window_bounds = array<i64: 128, 384>}, {pipeline_mode = #tpu.pipeline_mode<synchronous>, transform_indices = @transform_2, window_bounds = array<i64: 1, 384>}, {pipeline_mode = #tpu.pipeline_mode<synchronous>, transform_indices = @transform_3, window_bounds = array<i64: 384, 512>}, {pipeline_mode = #tpu.pipeline_mode<synchronous>, transform_indices = @transform_4, window_bounds = array<i64: 1, 512>}, {pipeline_mode = #tpu.pipeline_mode<synchronous>, transform_indices = @transform_5, window_bounds = array<i64: 512, 128>}, {pipeline_mode = #tpu.pipeline_mode<synchronous>, transform_indices = @transform_6, window_bounds = array<i64: 1, 128>}, {transform_indices = @transform_7, window_bounds = array<i64: 16, 128>}]} {
    %c0 = arith.constant 0 : index
    %c0_0 = arith.constant 0 : index
    %0 = vector.load %arg1[%c0, %c0_0] : memref<16x128xbf16, #tpu.memory_space<vmem>>, vector<16x128xbf16>
    %c0_1 = arith.constant 0 : index
    %c0_2 = arith.constant 0 : index
    %1 = vector.load %arg2[%c0_1, %c0_2] : memref<128x384xbf16, #tpu.memory_space<vmem>>, vector<128x384xbf16>
    %cst = arith.constant dense<0.000000e+00> : vector<16x384xf32>
    %2 = tpu.matmul %0, %1, %cst {dimension_numbers = #tpu.dot_dimension_numbers<[1], [0], [0], [1], [0, 0, 1, 1], [], []>} : vector<16x128xbf16>, vector<128x384xbf16>, vector<16x384xf32> -> vector<16x384xf32>
    %c0_3 = arith.constant 0 : index
    %c0_4 = arith.constant 0 : index
    %3 = vector.load %arg3[%c0_3, %c0_4] : memref<1x384xf32, #tpu.memory_space<vmem>>, vector<1x384xf32>
    %4 = vector.broadcast %3 : vector<1x384xf32> to vector<16x384xf32>
    %5 = arith.addf %2, %4 : vector<16x384xf32>
    %6 = math.tanh %5 : vector<16x384xf32>
    %7 = arith.truncf %6 : vector<16x384xf32> to vector<16x384xbf16>
    %c0_5 = arith.constant 0 : index
    %c0_6 = arith.constant 0 : index
    %8 = vector.load %arg4[%c0_5, %c0_6] : memref<384x512xbf16, #tpu.memory_space<vmem>>, vector<384x512xbf16>
    %cst_7 = arith.constant dense<0.000000e+00> : vector<16x512xf32>
    %9 = tpu.matmul %7, %8, %cst_7 {dimension_numbers = #tpu.dot_dimension_numbers<[1], [0], [0], [1], [0, 0, 1, 1], [], []>} : vector<16x384xbf16>, vector<384x512xbf16>, vector<16x512xf32> -> vector<16x512xf32>
    %c0_8 = arith.constant 0 : index
    %c0_9 = arith.constant 0 : index
    %10 = vector.load %arg5[%c0_8, %c0_9] : memref<1x512xf32, #tpu.memory_space<vmem>>, vector<1x512xf32>
    %11 = vector.broadcast %10 : vector<1x512xf32> to vector<16x512xf32>
    %12 = arith.addf %9, %11 : vector<16x512xf32>
    %13 = math.tanh %12 : vector<16x512xf32>
    %14 = arith.truncf %13 : vector<16x512xf32> to vector<16x512xbf16>
    %c0_10 = arith.constant 0 : index
    %c0_11 = arith.constant 0 : index
    %15 = vector.load %arg6[%c0_10, %c0_11] : memref<512x128xbf16, #tpu.memory_space<vmem>>, vector<512x128xbf16>
    %cst_12 = arith.constant dense<0.000000e+00> : vector<16x128xf32>
    %16 = tpu.matmul %14, %15, %cst_12 {dimension_numbers = #tpu.dot_dimension_numbers<[1], [0], [0], [1], [0, 0, 1, 1], [], []>} : vector<16x512xbf16>, vector<512x128xbf16>, vector<16x128xf32> -> vector<16x128xf32>
    %c0_13 = arith.constant 0 : index
    %c0_14 = arith.constant 0 : index
    %17 = vector.load %arg7[%c0_13, %c0_14] : memref<1x128xf32, #tpu.memory_space<vmem>>, vector<1x128xf32>
    %18 = vector.broadcast %17 : vector<1x128xf32> to vector<16x128xf32>
    %19 = arith.addf %16, %18 : vector<16x128xf32>
    %c0_15 = arith.constant 0 : index
    %c0_16 = arith.constant 0 : index
    %20 = vector.load %arg8[%c0_15, %c0_16] : memref<16x128xf32, #tpu.memory_space<vmem>>, vector<16x128xf32>
    tpu.vector_store %arg8[%c0_15, %c0_16], %19 {strides = array<i32>} : memref<16x128xf32, #tpu.memory_space<vmem>>, vector<16x128xf32>,
    return
  }
  func.func @transform_0(%arg0: i32) -> (i32, i32) {
    %c0_i32 = arith.constant 0 : i32
    %c0_i32_0 = arith.constant 0 : i32
    return %arg0, %c0_i32 : i32, i32
  }
  func.func @transform_1(%arg0: i32) -> (i32, i32) {
    %c0_i32 = arith.constant 0 : i32
    %c0_i32_0 = arith.constant 0 : i32
    %c0_i32_1 = arith.constant 0 : i32
    return %c0_i32, %c0_i32_0 : i32, i32
  }
  func.func @transform_2(%arg0: i32) -> (i32, i32) {
    %c0_i32 = arith.constant 0 : i32
    %c0_i32_0 = arith.constant 0 : i32
    %c0_i32_1 = arith.constant 0 : i32
    return %c0_i32, %c0_i32_0 : i32, i32
  }
  func.func @transform_3(%arg0: i32) -> (i32, i32) {
    %c0_i32 = arith.constant 0 : i32
    %c0_i32_0 = arith.constant 0 : i32
    %c0_i32_1 = arith.constant 0 : i32
    return %c0_i32, %c0_i32_0 : i32, i32
  }
  func.func @transform_4(%arg0: i32) -> (i32, i32) {
    %c0_i32 = arith.constant 0 : i32
    %c0_i32_0 = arith.constant 0 : i32
    %c0_i32_1 = arith.constant 0 : i32
    return %c0_i32, %c0_i32_0 : i32, i32
  }
  func.func @transform_5(%arg0: i32) -> (i32, i32) {
    %c0_i32 = arith.constant 0 : i32
    %c0_i32_0 = arith.constant 0 : i32
    %c0_i32_1 = arith.constant 0 : i32
    return %c0_i32, %c0_i32_0 : i32, i32
  }
  func.func @transform_6(%arg0: i32) -> (i32, i32) {
    %c0_i32 = arith.constant 0 : i32
    %c0_i32_0 = arith.constant 0 : i32
    %c0_i32_1 = arith.constant 0 : i32
    return %c0_i32, %c0_i32_0 : i32, i32
  }
  func.func @transform_7(%arg0: i32) -> (i32, i32) {
    %c0_i32 = arith.constant 0 : i32
    %c0_i32_0 = arith.constant 0 : i32
    return %arg0, %c0_i32 : i32, i32
  }
}

</mosaic_0001>

<llo_original>
// kernel: tpu_custom_call.1
$region0: #{tpu_custom_call.1}
  #allocation0 [shape = 'u32[]', space=smem, size = 0x4, offset = 0x4, fixed_abs, tag = 'smem constant byte address 0x4 - core index']
  #allocation1 [shape = 'u32[72,128]{1,0:T(1,128)}', space=vmem, size = 0x9000, scoped, tag = 'internal scratch']
  %s0 = inlined_call_operand.hbm [shape: bf16[16,128], index: 0, kind: input, shape index: {}]
  %s1 = inlined_call_operand.hbm [shape: bf16[128,384], index: 1, kind: input, shape index: {}]
  %s2 = inlined_call_operand.hbm [shape: f32[1,384], index: 2, kind: input, shape index: {}]
  %s3 = inlined_call_operand.hbm [shape: bf16[384,512], index: 3, kind: input, shape index: {}]
  %s4 = inlined_call_operand.hbm [shape: f32[1,512], index: 4, kind: input, shape index: {}]
  %s5 = inlined_call_operand.hbm [shape: bf16[512,128], index: 5, kind: input, shape index: {}]
  %s6 = inlined_call_operand.vmem [shape: f32[1,128], index: 6, kind: input, shape index: {}]
  %s7 = inlined_call_operand.hbm [shape: f32[16,128], index: 7, kind: output, shape index: {}]
  %s8 = sld [smem:[#allocation0]]
  $region62: #{tpu_custom_call.1} parent=0
    _
  %s10 = ssub.s32 1, %s8
  %s11 = scalar_select 0, %s10, %s8
  $region1: #{tpu_custom_call.1} parent=0
    #allocation2 [shape = 'u8[4096]{0}', space=vmem, size = 0x1000, scoped, tag = 'input window, operand 0, single buffered']
    #allocation3 [shape = 's32[1]{0}', space=sflag, size = 0x4, scoped, tag = 'scoped memory for tpu_custom_call.1']
    #allocation4 [shape = 's32[1]{0}', space=sflag, size = 0x4, scoped, tag = 'scoped memory for tpu_custom_call.1']
    #allocation5 [shape = 'u8[98304]{0}', space=vmem, size = 0x18000, scoped, tag = 'input window, operand 1, single buffered']
    #allocation6 [shape = 's32[1]{0}', space=sflag, size = 0x4, scoped, tag = 'scoped memory for tpu_custom_call.1']
    #allocation7 [shape = 'u8[1536]{0}', space=vmem, size = 0x800, scoped, tag = 'input window, operand 2, single buffered']
    #allocation8 [shape = 'u8[393216]{0}', space=vmem, size = 0x60000, scoped, tag = 'input window, operand 3, single buffered']
    #allocation9 [shape = 's32[1]{0}', space=sflag, size = 0x4, scoped, tag = 'scoped memory for tpu_custom_call.1']
    #allocation10 [shape = 'u8[2048]{0}', space=vmem, size = 0x800, scoped, tag = 'input window, operand 4, single buffered']
    #allocation11 [shape = 'u8[131072]{0}', space=vmem, size = 0x20000, scoped, tag = 'input window, operand 5, single buffered']
    #allocation12 [shape = 's32[1]{0}', space=sflag, size = 0x4, scoped, tag = 'scoped memory for tpu_custom_call.1']
    #allocation13 [shape = 'u8[8192]{0}', space=vmem, size = 0x2000, scoped, tag = 'output window, operand 0, single buffered']
    %12 = vsyncpa [#allocation3], 0
    %13 = vsyncpa [#allocation6], 0
    %14 = vsyncpa [#allocation9], 0
    %15 = vsyncpa [#allocation12], 0
    %16 = vsyncpa [#allocation4], 0
    // Predicated region
    $region2: #{tpu_custom_call.1} parent=1 // pred_check
      _
    $region3: #{tpu_custom_call.1} parent=1 // pred_check_branch
      %18 = sbr.rel (0) target = $region5
    $region4: #{tpu_custom_call.1} parent=1 // pred_region
      %20 = vsyncadd [#allocation3], 0
      %s21 = sshll.u32 %s0, 4
      %s22 = int_to_ptr.hbm [resolvable:$true] %s21
      %s23 = sshll.u32 [#allocation2], 4
      %s24 = int_to_ptr.vmem [resolvable:$true] %s23
      %29 = dma.hbm_to_vmem [thread:$0]  %s22, 128, %s24, [#allocation3], 64, 64, 4
    $region5: #{tpu_custom_call.1} parent=1 // pred_fallthru
      _
    // Predicated region
    $region6: #{tpu_custom_call.1} parent=1 // pred_check
      _
    $region7: #{tpu_custom_call.1} parent=1 // pred_check_branch
      %31 = sbr.rel (0) target = $region9
    $region8: #{tpu_custom_call.1} parent=1 // pred_region
      %33 = vsyncadd [#allocation6], 0
      %s34 = sshll.u32 %s1, 4
      %s35 = int_to_ptr.hbm [resolvable:$true] %s34
      %s36 = sshll.u32 [#allocation5], 4
      %s37 = int_to_ptr.vmem [resolvable:$true] %s36
      %42 = dma.hbm_to_vmem [thread:$0]  %s35, 3072, %s37, [#allocation6], 192, 192, 12
    $region9: #{tpu_custom_call.1} parent=1 // pred_fallthru
      _
    // Predicated region
    $region10: #{tpu_custom_call.1} parent=1 // pred_check
      _
    $region11: #{tpu_custom_call.1} parent=1 // pred_check_branch
      %44 = sbr.rel (0) target = $region13
    $region12: #{tpu_custom_call.1} parent=1 // pred_region
      %46 = vsyncadd [#allocation6], 0
      %s48 = sshll.u32 %s2, 4
      %s49 = int_to_ptr.hbm [resolvable:$true] %s48
      %s50 = sshll.u32 [#allocation7], 4
      %s51 = int_to_ptr.vmem [resolvable:$true] %s50
      %53 = dma.hbm_to_vmem [thread:$0]  %s49, 48, %s51, [#allocation6]
    $region13: #{tpu_custom_call.1} parent=1 // pred_fallthru
      _
    // Predicated region
    $region14: #{tpu_custom_call.1} parent=1 // pred_check
      _
    $region15: #{tpu_custom_call.1} parent=1 // pred_check_branch
      %55 = sbr.rel (0) target = $region17
    $region16: #{tpu_custom_call.1} parent=1 // pred_region
      %57 = vsyncadd [#allocation9], 0
      %s58 = sshll.u32 %s3, 4
      %s59 = int_to_ptr.hbm [resolvable:$true] %s58
      %s60 = sshll.u32 [#allocation8], 4
      %s61 = int_to_ptr.vmem [resolvable:$true] %s60
      %66 = dma.hbm_to_vmem [thread:$0]  %s59, 12288, %s61, [#allocation9], 256, 256, 16
    $region17: #{tpu_custom_call.1} parent=1 // pred_fallthru
      _
    // Predicated region
    $region18: #{tpu_custom_call.1} parent=1 // pred_check
      _
    $region19: #{tpu_custom_call.1} parent=1 // pred_check_branch
      %68 = sbr.rel (0) target = $region21
    $region20: #{tpu_custom_call.1} parent=1 // pred_region
      %70 = vsyncadd [#allocation9], 0
      %s72 = sshll.u32 %s4, 4
      %s73 = int_to_ptr.hbm [resolvable:$true] %s72
      %s74 = sshll.u32 [#allocation10], 4
      %s75 = int_to_ptr.vmem [resolvable:$true] %s74
      %77 = dma.hbm_to_vmem [thread:$0]  %s73, 64, %s75, [#allocation9]
    $region21: #{tpu_custom_call.1} parent=1 // pred_fallthru
      _
    // Predicated region
    $region22: #{tpu_custom_call.1} parent=1 // pred_check
      _
    $region23: #{tpu_custom_call.1} parent=1 // pred_check_branch
      %79 = sbr.rel (0) target = $region25
    $region24: #{tpu_custom_call.1} parent=1 // pred_region
      %81 = vsyncadd [#allocation12], 0
      %s82 = sshll.u32 %s5, 4
      %s83 = int_to_ptr.hbm [resolvable:$true] %s82
      %s84 = sshll.u32 [#allocation11], 4
      %s85 = int_to_ptr.vmem [resolvable:$true] %s84
      %90 = dma.hbm_to_vmem [thread:$0]  %s83, 4096, %s85, [#allocation12], 64, 64, 4
    $region25: #{tpu_custom_call.1} parent=1 // pred_fallthru
      _
    // Predicated region
    $region26: #{tpu_custom_call.1} parent=1 // pred_check
      _
    $region27: #{tpu_custom_call.1} parent=1 // pred_check_branch
      %92 = sbr.rel (0) target = $region29
    $region28: #{tpu_custom_call.1} parent=1 // pred_region
      _
    $region29: #{tpu_custom_call.1} parent=1 // pred_fallthru
      _
    // Predicated region
    $region30: #{tpu_custom_call.1} parent=1 // pred_check
      _
    $region31: #{tpu_custom_call.1} parent=1 // pred_check_branch
      %94 = sbr.rel (0) target = $region33
    $region32: #{tpu_custom_call.1} parent=1 // pred_region
      %96 = dma.done [#allocation3], 128
    $region33: #{tpu_custom_call.1} parent=1 // pred_fallthru
      _
    // Predicated region
    $region34: #{tpu_custom_call.1} parent=1 // pred_check
      _
    $region35: #{tpu_custom_call.1} parent=1 // pred_check_branch
      %98 = sbr.rel (0) target = $region37
    $region36: #{tpu_custom_call.1} parent=1 // pred_region
      %100 = dma.done [#allocation6], 3072
    $region37: #{tpu_custom_call.1} parent=1 // pred_fallthru
      _
    // Predicated region
    $region38: #{tpu_custom_call.1} parent=1 // pred_check
      _
    $region39: #{tpu_custom_call.1} parent=1 // pred_check_branch
      %102 = sbr.rel (0) target = $region41
    $region40: #{tpu_custom_call.1} parent=1 // pred_region
      %104 = dma.done [#allocation6], 48
    $region41: #{tpu_custom_call.1} parent=1 // pred_fallthru
      _
    // Predicated region
    $region42: #{tpu_custom_call.1} parent=1 // pred_check
      _
    $region43: #{tpu_custom_call.1} parent=1 // pred_check_branch
      %106 = sbr.rel (0) target = $region45
    $region44: #{tpu_custom_call.1} parent=1 // pred_region
      %108 = dma.done [#allocation9], 12288
    $region45: #{tpu_custom_call.1} parent=1 // pred_fallthru
      _
    // Predicated region
    $region46: #{tpu_custom_call.1} parent=1 // pred_check
      _
    $region47: #{tpu_custom_call.1} parent=1 // pred_check_branch
      %110 = sbr.rel (0) target = $region49
    $region48: #{tpu_custom_call.1} parent=1 // pred_region
      %112 = dma.done [#allocation9], 64
    $region49: #{tpu_custom_call.1} parent=1 // pred_fallthru
      _
    // Predicated region
    $region50: #{tpu_custom_call.1} parent=1 // pred_check
      _
    $region51: #{tpu_custom_call.1} parent=1 // pred_check_branch
      %114 = sbr.rel (0) target = $region53
    $region52: #{tpu_custom_call.1} parent=1 // pred_region
      %116 = dma.done [#allocation12], 4096
    $region53: #{tpu_custom_call.1} parent=1 // pred_fallthru
      _
    %v117 = vld [vmem:[#allocation2] sm:$0xf]
    %v118 = vld [vmem:[#allocation2 + $0x4] sm:$0xf]
    %v119 = vld [vmem:[#allocation5] sm:$0xff]
    %v120 = vld [vmem:[#allocation5 + $0x8] sm:$0xf]
    %v121 = vld [vmem:[#allocation5 + $0xc] sm:$0xff]
    %v122 = vld [vmem:[#allocation5 + $0x14] sm:$0xf]
    %v123 = vld [vmem:[#allocation5 + $0x18] sm:$0xff]
    %v124 = vld [vmem:[#allocation5 + $0x20] sm:$0xf]
    %v125 = vld [vmem:[#allocation5 + $0x24] sm:$0xff]
    %v126 = vld [vmem:[#allocation5 + $0x2c] sm:$0xf]
    %v127 = vld [vmem:[#allocation5 + $0x30] sm:$0xff]
    %v128 = vld [vmem:[#allocation5 + $0x38] sm:$0xf]
    %v129 = vld [vmem:[#allocation5 + $0x3c] sm:$0xff]
    %v130 = vld [vmem:[#allocation5 + $0x44] sm:$0xf]
    %v131 = vld [vmem:[#allocation5 + $0x48] sm:$0xff]
    %v132 = vld [vmem:[#allocation5 + $0x50] sm:$0xf]
    %v133 = vld [vmem:[#allocation5 + $0x54] sm:$0xff]
    %v134 = vld [vmem:[#allocation5 + $0x5c] sm:$0xf]
    %v135 = vld [vmem:[#allocation5 + $0x60] sm:$0xff]
    %v136 = vld [vmem:[#allocation5 + $0x68] sm:$0xf]
    %v137 = vld [vmem:[#allocation5 + $0x6c] sm:$0xff]
    %v138 = vld [vmem:[#allocation5 + $0x74] sm:$0xf]
    %v139 = vld [vmem:[#allocation5 + $0x78] sm:$0xff]
    %v140 = vld [vmem:[#allocation5 + $0x80] sm:$0xf]
    %v141 = vld [vmem:[#allocation5 + $0x84] sm:$0xff]
    %v142 = vld [vmem:[#allocation5 + $0x8c] sm:$0xf]
    %v143 = vld [vmem:[#allocation5 + $0x90] sm:$0xff]
    %v144 = vld [vmem:[#allocation5 + $0x98] sm:$0xf]
    %v145 = vld [vmem:[#allocation5 + $0x9c] sm:$0xff]
    %v146 = vld [vmem:[#allocation5 + $0xa4] sm:$0xf]
    %v147 = vld [vmem:[#allocation5 + $0xa8] sm:$0xff]
    %v148 = vld [vmem:[#allocation5 + $0xb0] sm:$0xf]
    %v149 = vld [vmem:[#allocation5 + $0xb4] sm:$0xff]
    %v150 = vld [vmem:[#allocation5 + $0xbc] sm:$0xf]
    %v151 = vld [vmem:[#allocation7] sm:$0x7]
    %v153 = vperm.slane %v151, 0
    %v154 = vperm.slane %v151, 1
    %v155 = vperm.slane %v151, 2
    %v161 = vunpack.c.l.b16 %v117
    %v162 = vunpack.c.l.b16 %v118
    %v163 = vpack.c.b16 %v162, %v161
    %v197 = vunpack.c.l.b16 %v119
    %v198 = vunpack.c.h.b16 %v119
    %v199 = vunpack.c.l.b16 %v120
    %v200 = vunpack.c.l.b16 %v121
    %v201 = vunpack.c.h.b16 %v121
    %v202 = vunpack.c.l.b16 %v122
    %v203 = vunpack.c.l.b16 %v123
    %v204 = vunpack.c.h.b16 %v123
    %v205 = vunpack.c.l.b16 %v124
    %v206 = vunpack.c.l.b16 %v125
    %v207 = vunpack.c.h.b16 %v125
    %v208 = vunpack.c.l.b16 %v126
    %v209 = vunpack.c.l.b16 %v127
    %v210 = vunpack.c.h.b16 %v127
    %v211 = vunpack.c.l.b16 %v128
    %v212 = vunpack.c.l.b16 %v129
    %v213 = vunpack.c.h.b16 %v129
    %v214 = vunpack.c.l.b16 %v130
    %v215 = vunpack.c.l.b16 %v131
    %v216 = vunpack.c.h.b16 %v131
    %v217 = vunpack.c.l.b16 %v132
    %v218 = vunpack.c.l.b16 %v133
    %v219 = vunpack.c.h.b16 %v133
    %v220 = vunpack.c.l.b16 %v134
    %v221 = vunpack.c.l.b16 %v135
    %v222 = vunpack.c.h.b16 %v135
    %v223 = vunpack.c.l.b16 %v136
    %v224 = vunpack.c.l.b16 %v137
    %v225 = vunpack.c.h.b16 %v137
    %v226 = vunpack.c.l.b16 %v138
    %v227 = vunpack.c.l.b16 %v139
    %v228 = vunpack.c.h.b16 %v139
    %v229 = vunpack.c.l.b16 %v140
    %v230 = vunpack.c.l.b16 %v141
    %v231 = vunpack.c.h.b16 %v141
    %v232 = vunpack.c.l.b16 %v142
    %v233 = vunpack.c.l.b16 %v143
    %v234 = vunpack.c.h.b16 %v143
    %v235 = vunpack.c.l.b16 %v144
    %v236 = vunpack.c.l.b16 %v145
    %v237 = vunpack.c.h.b16 %v145
    %v238 = vunpack.c.l.b16 %v146
    %v239 = vunpack.c.l.b16 %v147
    %v240 = vunpack.c.h.b16 %v147
    %v241 = vunpack.c.l.b16 %v148
    %v242 = vunpack.c.l.b16 %v149
    %v243 = vunpack.c.h.b16 %v149
    %v244 = vunpack.c.l.b16 %v150
    %v245 = vpack.c.b16 %v200, %v197
    %v246 = vpack.c.b16 %v201, %v198
    %v247 = vpack.c.b16 %v202, %v199
    %v248 = vpack.c.b16 %v206, %v203
    %v249 = vpack.c.b16 %v207, %v204
    %v250 = vpack.c.b16 %v208, %v205
    %v251 = vpack.c.b16 %v212, %v209
    %v252 = vpack.c.b16 %v213, %v210
    %v253 = vpack.c.b16 %v214, %v211
    %v254 = vpack.c.b16 %v218, %v215
    %v255 = vpack.c.b16 %v219, %v216
    %v256 = vpack.c.b16 %v220, %v217
    %v257 = vpack.c.b16 %v224, %v221
    %v258 = vpack.c.b16 %v225, %v222
    %v259 = vpack.c.b16 %v226, %v223
    %v260 = vpack.c.b16 %v230, %v227
    %v261 = vpack.c.b16 %v231, %v228
    %v262 = vpack.c.b16 %v232, %v229
    %v263 = vpack.c.b16 %v236, %v233
    %v264 = vpack.c.b16 %v237, %v234
    %v265 = vpack.c.b16 %v238, %v235
    %v266 = vpack.c.b16 %v242, %v239
    %v267 = vpack.c.b16 %v243, %v240
    %v268 = vpack.c.b16 %v244, %v241
    %293 = vmatpush.bf16.msra.mxu0 %v266
    %294 = vmatpush.bf16.msra.mxu0 %v263
    %295 = vmatpush.bf16.msra.mxu0 %v260
    %296 = vmatpush.bf16.msra.mxu0 %v257
    %297 = vmatpush.bf16.msra.mxu0 %v254
    %298 = vmatpush.bf16.msra.mxu0 %v251
    %299 = vmatpush.bf16.msra.mxu0 %v248
    %300 = vmatpush.bf16.msra.mxu0 %v245
    %301 = vmatmul.bf16.gmra.mxu0 %v163
    %v302 = vpop.f32.mrf.mxu0
    %v303 = vadd.f32 %v153, %v302
    %v304 = vpop.f32.mrf.mxu0
    %v305 = vadd.f32 %v153, %v304
    %306 = vdwg.mxu0
    %307 = vmatpush.bf16.msra.mxu0 %v267
    %308 = vmatpush.bf16.msra.mxu0 %v264
    %309 = vmatpush.bf16.msra.mxu0 %v261
    %310 = vmatpush.bf16.msra.mxu0 %v258
    %311 = vmatpush.bf16.msra.mxu0 %v255
    %312 = vmatpush.bf16.msra.mxu0 %v252
    %313 = vmatpush.bf16.msra.mxu0 %v249
    %314 = vmatpush.bf16.msra.mxu0 %v246
    %315 = vmatmul.bf16.gmra.mxu0 %v163
    %v316 = vpop.f32.mrf.mxu0
    %v317 = vadd.f32 %v154, %v316
    %v318 = vpop.f32.mrf.mxu0
    %v319 = vadd.f32 %v154, %v318
    %320 = vdwg.mxu0
    %321 = vmatpush.bf16.msra.mxu0 %v268
    %322 = vmatpush.bf16.msra.mxu0 %v265
    %323 = vmatpush.bf16.msra.mxu0 %v262
    %324 = vmatpush.bf16.msra.mxu0 %v259
    %325 = vmatpush.bf16.msra.mxu0 %v256
    %326 = vmatpush.bf16.msra.mxu0 %v253
    %327 = vmatpush.bf16.msra.mxu0 %v250
    %328 = vmatpush.bf16.msra.mxu0 %v247
    %329 = vmatmul.bf16.gmra.mxu0 %v163
    %v330 = vpop.f32.mrf.mxu0
    %v331 = vadd.f32 %v155, %v330
    %v332 = vpop.f32.mrf.mxu0
    %v333 = vadd.f32 %v155, %v332
    %334 = vdwg.mxu0
    %v335 = vtanh.pop %v303
    %v336 = vtanh.pop %v317
    %v337 = vtanh.pop %v331
    %v338 = vtanh.pop %v305
    %v339 = vtanh.pop %v319
    %v340 = vtanh.pop %v333
    %v341 = vpack.c.bf16 %v338, %v335
    %v342 = vpack.c.bf16 %v339, %v336
    %v343 = vpack.c.bf16 %v340, %v337
    %v344 = vld [vmem:[#allocation8] sm:$0xff]
    %v345 = vld [vmem:[#allocation8 + $0x8] sm:$0xff]
    %v346 = vld [vmem:[#allocation8 + $0x10] sm:$0xff]
    %v347 = vld [vmem:[#allocation8 + $0x18] sm:$0xff]
    %v348 = vld [vmem:[#allocation8 + $0x20] sm:$0xff]
    %v349 = vld [vmem:[#allocation8 + $0x28] sm:$0xff]
    %v350 = vld [vmem:[#allocation8 + $0x30] sm:$0xff]
    %v351 = vld [vmem:[#allocation8 + $0x38] sm:$0xff]
    %v352 = vld [vmem:[#allocation8 + $0x40] sm:$0xff]
    %v353 = vld [vmem:[#allocation8 + $0x48] sm:$0xff]
    %v354 = vld [vmem:[#allocation8 + $0x50] sm:$0xff]
    %v355 = vld [vmem:[#allocation8 + $0x58] sm:$0xff]
    %v356 = vld [vmem:[#allocation8 + $0x60] sm:$0xff]
    %v357 = vld [vmem:[#allocation8 + $0x68] sm:$0xff]
    %v358 = vld [vmem:[#allocation8 + $0x70] sm:$0xff]
    %v359 = vld [vmem:[#allocation8 + $0x78] sm:$0xff]
    %v360 = vld [vmem:[#allocation8 + $0x80] sm:$0xff]
    %v361 = vld [vmem:[#allocation8 + $0x88] sm:$0xff]
    %v362 = vld [vmem:[#allocation8 + $0x90] sm:$0xff]
    %v363 = vld [vmem:[#allocation8 + $0x98] sm:$0xff]
    %v364 = vld [vmem:[#allocation8 + $0xa0] sm:$0xff]
    %v365 = vld [vmem:[#allocation8 + $0xa8] sm:$0xff]
    %v366 = vld [vmem:[#allocation8 + $0xb0] sm:$0xff]
    %v367 = vld [vmem:[#allocation8 + $0xb8] sm:$0xff]
    %v368 = vld [vmem:[#allocation8 + $0xc0] sm:$0xff]
    %v369 = vld [vmem:[#allocation8 + $0xc8] sm:$0xff]
    %v370 = vld [vmem:[#allocation8 + $0xd0] sm:$0xff]
    %v371 = vld [vmem:[#allocation8 + $0xd8] sm:$0xff]
    %v372 = vld [vmem:[#allocation8 + $0xe0] sm:$0xff]
    %v373 = vld [vmem:[#allocation8 + $0xe8] sm:$0xff]
    %v374 = vld [vmem:[#allocation8 + $0xf0] sm:$0xff]
    %v375 = vld [vmem:[#allocation8 + $0xf8] sm:$0xff]
    %v376 = vld [vmem:[#allocation8 + $0x100] sm:$0xff]
    %v377 = vld [vmem:[#allocation8 + $0x108] sm:$0xff]
    %v378 = vld [vmem:[#allocation8 + $0x110] sm:$0xff]
    %v379 = vld [vmem:[#allocation8 + $0x118] sm:$0xff]
    %v380 = vld [vmem:[#allocation8 + $0x120] sm:$0xff]
    %v381 = vld [vmem:[#allocation8 + $0x128] sm:$0xff]
    %v382 = vld [vmem:[#allocation8 + $0x130] sm:$0xff]
    %v383 = vld [vmem:[#allocation8 + $0x138] sm:$0xff]
    %v384 = vld [vmem:[#allocation8 + $0x140] sm:$0xff]
    %v385 = vld [vmem:[#allocation8 + $0x148] sm:$0xff]
    %v386 = vld [vmem:[#allocation8 + $0x150] sm:$0xff]
    %v387 = vld [vmem:[#allocation8 + $0x158] sm:$0xff]
    %v388 = vld [vmem:[#allocation8 + $0x160] sm:$0xff]
    %v389 = vld [vmem:[#allocation8 + $0x168] sm:$0xff]
    %v390 = vld [vmem:[#allocation8 + $0x170] sm:$0xff]
    %v391 = vld [vmem:[#allocation8 + $0x178] sm:$0xff]
    %v392 = vld [vmem:[#allocation8 + $0x180] sm:$0xff]
    %v393 = vld [vmem:[#allocation8 + $0x188] sm:$0xff]
    %v394 = vld [vmem:[#allocation8 + $0x190] sm:$0xff]
    %v395 = vld [vmem:[#allocation8 + $0x198] sm:$0xff]
    %v396 = vld [vmem:[#allocation8 + $0x1a0] sm:$0xff]
    %v397 = vld [vmem:[#allocation8 + $0x1a8] sm:$0xff]
    %v398 = vld [vmem:[#allocation8 + $0x1b0] sm:$0xff]
    %v399 = vld [vmem:[#allocation8 + $0x1b8] sm:$0xff]
    %v400 = vld [vmem:[#allocation8 + $0x1c0] sm:$0xff]
    %v401 = vld [vmem:[#allocation8 + $0x1c8] sm:$0xff]
    %v402 = vld [vmem:[#allocation8 + $0x1d0] sm:$0xff]
    %v403 = vld [vmem:[#allocation8 + $0x1d8] sm:$0xff]
    %v404 = vld [vmem:[#allocation8 + $0x1e0] sm:$0xff]
    %v405 = vld [vmem:[#allocation8 + $0x1e8] sm:$0xff]
    %v406 = vld [vmem:[#allocation8 + $0x1f0] sm:$0xff]
    %v407 = vld [vmem:[#allocation8 + $0x1f8] sm:$0xff]
    %v408 = vld [vmem:[#allocation8 + $0x200] sm:$0xff]
    %v409 = vld [vmem:[#allocation8 + $0x208] sm:$0xff]
    %v410 = vld [vmem:[#allocation8 + $0x210] sm:$0xff]
    %v411 = vld [vmem:[#allocation8 + $0x218] sm:$0xff]
    %v412 = vld [vmem:[#allocation8 + $0x220] sm:$0xff]
    %v413 = vld [vmem:[#allocation8 + $0x228] sm:$0xff]
    %v414 = vld [vmem:[#allocation8 + $0x230] sm:$0xff]
    %v415 = vld [vmem:[#allocation8 + $0x238] sm:$0xff]
    %v416 = vld [vmem:[#allocation8 + $0x240] sm:$0xff]
    %v417 = vld [vmem:[#allocation8 + $0x248] sm:$0xff]
    %v418 = vld [vmem:[#allocation8 + $0x250] sm:$0xff]
    %v419 = vld [vmem:[#allocation8 + $0x258] sm:$0xff]
    %v420 = vld [vmem:[#allocation8 + $0x260] sm:$0xff]
    %v421 = vld [vmem:[#allocation8 + $0x268] sm:$0xff]
    %v422 = vld [vmem:[#allocation8 + $0x270] sm:$0xff]
    %v423 = vld [vmem:[#allocation8 + $0x278] sm:$0xff]
    %v424 = vld [vmem:[#allocation8 + $0x280] sm:$0xff]
    %v425 = vld [vmem:[#allocation8 + $0x288] sm:$0xff]
    %v426 = vld [vmem:[#allocation8 + $0x290] sm:$0xff]
    %v427 = vld [vmem:[#allocation8 + $0x298] sm:$0xff]
    %v428 = vld [vmem:[#allocation8 + $0x2a0] sm:$0xff]
    %v429 = vld [vmem:[#allocation8 + $0x2a8] sm:$0xff]
    %v430 = vld [vmem:[#allocation8 + $0x2b0] sm:$0xff]
    %v431 = vld [vmem:[#allocation8 + $0x2b8] sm:$0xff]
    %v432 = vld [vmem:[#allocation8 + $0x2c0] sm:$0xff]
    %v433 = vld [vmem:[#allocation8 + $0x2c8] sm:$0xff]
    %v434 = vld [vmem:[#allocation8 + $0x2d0] sm:$0xff]
    %v435 = vld [vmem:[#allocation8 + $0x2d8] sm:$0xff]
    %v436 = vld [vmem:[#allocation8 + $0x2e0] sm:$0xff]
    %v437 = vld [vmem:[#allocation8 + $0x2e8] sm:$0xff]
    %v438 = vld [vmem:[#allocation8 + $0x2f0] sm:$0xff]
    %v439 = vld [vmem:[#allocation8 + $0x2f8] sm:$0xff]
    %v440 = vld [vmem:[#allocation10] sm:$0xf]
    %v442 = vperm.slane %v440, 0
    %v443 = vperm.slane %v440, 1
    %v444 = vperm.slane %v440, 2
    %v445 = vperm.slane %v440, 3
    %v546 = vunpack.c.l.b16 %v344
    %v547 = vunpack.c.h.b16 %v344
    %v548 = vunpack.c.l.b16 %v345
    %v549 = vunpack.c.h.b16 %v345
    %v550 = vunpack.c.l.b16 %v346
    %v551 = vunpack.c.h.b16 %v346
    %v552 = vunpack.c.l.b16 %v347
    %v553 = vunpack.c.h.b16 %v347
    %v554 = vunpack.c.l.b16 %v348
    %v555 = vunpack.c.h.b16 %v348
    %v556 = vunpack.c.l.b16 %v349
    %v557 = vunpack.c.h.b16 %v349
    %v558 = vunpack.c.l.b16 %v350
    %v559 = vunpack.c.h.b16 %v350
    %v560 = vunpack.c.l.b16 %v351
    %v561 = vunpack.c.h.b16 %v351
    %v562 = vunpack.c.l.b16 %v352
    %v563 = vunpack.c.h.b16 %v352
    %v564 = vunpack.c.l.b16 %v353
    %v565 = vunpack.c.h.b16 %v353
    %v566 = vunpack.c.l.b16 %v354
    %v567 = vunpack.c.h.b16 %v354
    %v568 = vunpack.c.l.b16 %v355
    %v569 = vunpack.c.h.b16 %v355
    %v570 = vunpack.c.l.b16 %v356
    %v571 = vunpack.c.h.b16 %v356
    %v572 = vunpack.c.l.b16 %v357
    %v573 = vunpack.c.h.b16 %v357
    %v574 = vunpack.c.l.b16 %v358
    %v575 = vunpack.c.h.b16 %v358
    %v576 = vunpack.c.l.b16 %v359
    %v577 = vunpack.c.h.b16 %v359
    %v578 = vunpack.c.l.b16 %v360
    %v579 = vunpack.c.h.b16 %v360
    %v580 = vunpack.c.l.b16 %v361
    %v581 = vunpack.c.h.b16 %v361
    %v582 = vunpack.c.l.b16 %v362
    %v583 = vunpack.c.h.b16 %v362
    %v584 = vunpack.c.l.b16 %v363
    %v585 = vunpack.c.h.b16 %v363
    %v586 = vunpack.c.l.b16 %v364
    %v587 = vunpack.c.h.b16 %v364
    %v588 = vunpack.c.l.b16 %v365
    %v589 = vunpack.c.h.b16 %v365
    %v590 = vunpack.c.l.b16 %v366
    %v591 = vunpack.c.h.b16 %v366
    %v592 = vunpack.c.l.b16 %v367
    %v593 = vunpack.c.h.b16 %v367
    %v594 = vunpack.c.l.b16 %v368
    %v595 = vunpack.c.h.b16 %v368
    %v596 = vunpack.c.l.b16 %v369
    %v597 = vunpack.c.h.b16 %v369
    %v598 = vunpack.c.l.b16 %v370
    %v599 = vunpack.c.h.b16 %v370
    %v600 = vunpack.c.l.b16 %v371
    %v601 = vunpack.c.h.b16 %v371
    %v602 = vunpack.c.l.b16 %v372
    %v603 = vunpack.c.h.b16 %v372
    %v604 = vunpack.c.l.b16 %v373
    %v605 = vunpack.c.h.b16 %v373
    %v606 = vunpack.c.l.b16 %v374
    %v607 = vunpack.c.h.b16 %v374
    %v608 = vunpack.c.l.b16 %v375
    %v609 = vunpack.c.h.b16 %v375
    %v610 = vunpack.c.l.b16 %v376
    %v611 = vunpack.c.h.b16 %v376
    %v612 = vunpack.c.l.b16 %v377
    %v613 = vunpack.c.h.b16 %v377
    %v614 = vunpack.c.l.b16 %v378
    %v615 = vunpack.c.h.b16 %v378
    %v616 = vunpack.c.l.b16 %v379
    %v617 = vunpack.c.h.b16 %v379
    %v618 = vunpack.c.l.b16 %v380
    %v619 = vunpack.c.h.b16 %v380
    %v620 = vunpack.c.l.b16 %v381
    %v621 = vunpack.c.h.b16 %v381
    %v622 = vunpack.c.l.b16 %v382
    %v623 = vunpack.c.h.b16 %v382
    %v624 = vunpack.c.l.b16 %v383
    %v625 = vunpack.c.h.b16 %v383
    %v626 = vunpack.c.l.b16 %v384
    %v627 = vunpack.c.h.b16 %v384
    %v628 = vunpack.c.l.b16 %v385
    %v629 = vunpack.c.h.b16 %v385
    %v630 = vunpack.c.l.b16 %v386
    %v631 = vunpack.c.h.b16 %v386
    %v632 = vunpack.c.l.b16 %v387
    %v633 = vunpack.c.h.b16 %v387
    %v634 = vunpack.c.l.b16 %v388
    %v635 = vunpack.c.h.b16 %v388
    %v636 = vunpack.c.l.b16 %v389
    %v637 = vunpack.c.h.b16 %v389
    %v638 = vunpack.c.l.b16 %v390
    %v639 = vunpack.c.h.b16 %v390
    %v640 = vunpack.c.l.b16 %v391
    %v641 = vunpack.c.h.b16 %v391
    %v642 = vunpack.c.l.b16 %v392
    %v643 = vunpack.c.h.b16 %v392
    %v644 = vunpack.c.l.b16 %v393
    %v645 = vunpack.c.h.b16 %v393
    %v646 = vunpack.c.l.b16 %v394
    %v647 = vunpack.c.h.b16 %v394
    %v648 = vunpack.c.l.b16 %v395
    %v649 = vunpack.c.h.b16 %v395
    %v650 = vunpack.c.l.b16 %v396
    %v651 = vunpack.c.h.b16 %v396
    %v652 = vunpack.c.l.b16 %v397
    %v653 = vunpack.c.h.b16 %v397
    %v654 = vunpack.c.l.b16 %v398
    %v655 = vunpack.c.h.b16 %v398
    %v656 = vunpack.c.l.b16 %v399
    %v657 = vunpack.c.h.b16 %v399
    %v658 = vunpack.c.l.b16 %v400
    %v659 = vunpack.c.h.b16 %v400
    %v660 = vunpack.c.l.b16 %v401
    %v661 = vunpack.c.h.b16 %v401
    %v662 = vunpack.c.l.b16 %v402
    %v663 = vunpack.c.h.b16 %v402
    %v664 = vunpack.c.l.b16 %v403
    %v665 = vunpack.c.h.b16 %v403
    %v666 = vunpack.c.l.b16 %v404
    %v667 = vunpack.c.h.b16 %v404
    %v668 = vunpack.c.l.b16 %v405
    %v669 = vunpack.c.h.b16 %v405
    %v670 = vunpack.c.l.b16 %v406
    %v671 = vunpack.c.h.b16 %v406
    %v672 = vunpack.c.l.b16 %v407
    %v673 = vunpack.c.h.b16 %v407
    %v674 = vunpack.c.l.b16 %v408
    %v675 = vunpack.c.h.b16 %v408
    %v676 = vunpack.c.l.b16 %v409
    %v677 = vunpack.c.h.b16 %v409
    %v678 = vunpack.c.l.b16 %v410
    %v679 = vunpack.c.h.b16 %v410
    %v680 = vunpack.c.l.b16 %v411
    %v681 = vunpack.c.h.b16 %v411
    %v682 = vunpack.c.l.b16 %v412
    %v683 = vunpack.c.h.b16 %v412
    %v684 = vunpack.c.l.b16 %v413
    %v685 = vunpack.c.h.b16 %v413
    %v686 = vunpack.c.l.b16 %v414
    %v687 = vunpack.c.h.b16 %v414
    %v688 = vunpack.c.l.b16 %v415
    %v689 = vunpack.c.h.b16 %v415
    %v690 = vunpack.c.l.b16 %v416
    %v691 = vunpack.c.h.b16 %v416
    %v692 = vunpack.c.l.b16 %v417
    %v693 = vunpack.c.h.b16 %v417
    %v694 = vunpack.c.l.b16 %v418
    %v695 = vunpack.c.h.b16 %v418
    %v696 = vunpack.c.l.b16 %v419
    %v697 = vunpack.c.h.b16 %v419
    %v698 = vunpack.c.l.b16 %v420
    %v699 = vunpack.c.h.b16 %v420
    %v700 = vunpack.c.l.b16 %v421
    %v701 = vunpack.c.h.b16 %v421
    %v702 = vunpack.c.l.b16 %v422
    %v703 = vunpack.c.h.b16 %v422
    %v704 = vunpack.c.l.b16 %v423
    %v705 = vunpack.c.h.b16 %v423
    %v706 = vunpack.c.l.b16 %v424
    %v707 = vunpack.c.h.b16 %v424
    %v708 = vunpack.c.l.b16 %v425
    %v709 = vunpack.c.h.b16 %v425
    %v710 = vunpack.c.l.b16 %v426
    %v711 = vunpack.c.h.b16 %v426
    %v712 = vunpack.c.l.b16 %v427
    %v713 = vunpack.c.h.b16 %v427
    %v714 = vunpack.c.l.b16 %v428
    %v715 = vunpack.c.h.b16 %v428
    %v716 = vunpack.c.l.b16 %v429
    %v717 = vunpack.c.h.b16 %v429
    %v718 = vunpack.c.l.b16 %v430
    %v719 = vunpack.c.h.b16 %v430
    %v720 = vunpack.c.l.b16 %v431
    %v721 = vunpack.c.h.b16 %v431
    %v722 = vunpack.c.l.b16 %v432
    %v723 = vunpack.c.h.b16 %v432
    %v724 = vunpack.c.l.b16 %v433
    %v725 = vunpack.c.h.b16 %v433
    %v726 = vunpack.c.l.b16 %v434
    %v727 = vunpack.c.h.b16 %v434
    %v728 = vunpack.c.l.b16 %v435
    %v729 = vunpack.c.h.b16 %v435
    %v730 = vunpack.c.l.b16 %v436
    %v731 = vunpack.c.h.b16 %v436
    %v732 = vunpack.c.l.b16 %v437
    %v733 = vunpack.c.h.b16 %v437
    %v734 = vunpack.c.l.b16 %v438
    %v735 = vunpack.c.h.b16 %v438
    %v736 = vunpack.c.l.b16 %v439
    %v737 = vunpack.c.h.b16 %v439
    %v738 = vpack.c.b16 %v550, %v546
    %v739 = vpack.c.b16 %v551, %v547
    %v740 = vpack.c.b16 %v552, %v548
    %v741 = vpack.c.b16 %v553, %v549
    %v742 = vpack.c.b16 %v558, %v554
    %v743 = vpack.c.b16 %v559, %v555
    %v744 = vpack.c.b16 %v560, %v556
    %v745 = vpack.c.b16 %v561, %v557
    %v746 = vpack.c.b16 %v566, %v562
    %v747 = vpack.c.b16 %v567, %v563
    %v748 = vpack.c.b16 %v568, %v564
    %v749 = vpack.c.b16 %v569, %v565
    %v750 = vpack.c.b16 %v574, %v570
    %v751 = vpack.c.b16 %v575, %v571
    %v752 = vpack.c.b16 %v576, %v572
    %v753 = vpack.c.b16 %v577, %v573
    %v754 = vpack.c.b16 %v582, %v578
    %v755 = vpack.c.b16 %v583, %v579
    %v756 = vpack.c.b16 %v584, %v580
    %v757 = vpack.c.b16 %v585, %v581
    %v758 = vpack.c.b16 %v590, %v586
    %v759 = vpack.c.b16 %v591, %v587
    %v760 = vpack.c.b16 %v592, %v588
    %v761 = vpack.c.b16 %v593, %v589
    %v762 = vpack.c.b16 %v598, %v594
    %v763 = vpack.c.b16 %v599, %v595
    %v764 = vpack.c.b16 %v600, %v596
    %v765 = vpack.c.b16 %v601, %v597
    %v766 = vpack.c.b16 %v606, %v602
    %v767 = vpack.c.b16 %v607, %v603
    %v768 = vpack.c.b16 %v608, %v604
    %v769 = vpack.c.b16 %v609, %v605
    %v770 = vpack.c.b16 %v614, %v610
    %v771 = vpack.c.b16 %v615, %v611
    %v772 = vpack.c.b16 %v616, %v612
    %v773 = vpack.c.b16 %v617, %v613
    %v774 = vpack.c.b16 %v622, %v618
    %v775 = vpack.c.b16 %v623, %v619
    %v776 = vpack.c.b16 %v624, %v620
    %v777 = vpack.c.b16 %v625, %v621
    %v778 = vpack.c.b16 %v630, %v626
    %v779 = vpack.c.b16 %v631, %v627
    %v780 = vpack.c.b16 %v632, %v628
    %v781 = vpack.c.b16 %v633, %v629
    %v782 = vpack.c.b16 %v638, %v634
    %v783 = vpack.c.b16 %v639, %v635
    %v784 = vpack.c.b16 %v640, %v636
    %v785 = vpack.c.b16 %v641, %v637
    %v786 = vpack.c.b16 %v646, %v642
    %v787 = vpack.c.b16 %v647, %v643
    %v788 = vpack.c.b16 %v648, %v644
    %v789 = vpack.c.b16 %v649, %v645
    %v790 = vpack.c.b16 %v654, %v650
    %v791 = vpack.c.b16 %v655, %v651
    %v792 = vpack.c.b16 %v656, %v652
    %v793 = vpack.c.b16 %v657, %v653
    %v794 = vpack.c.b16 %v662, %v658
    %v795 = vpack.c.b16 %v663, %v659
    %v796 = vpack.c.b16 %v664, %v660
    %v797 = vpack.c.b16 %v665, %v661
    %v798 = vpack.c.b16 %v670, %v666
    %v799 = vpack.c.b16 %v671, %v667
    %v800 = vpack.c.b16 %v672, %v668
    %v801 = vpack.c.b16 %v673, %v669
    %v802 = vpack.c.b16 %v678, %v674
    %v803 = vpack.c.b16 %v679, %v675
    %v804 = vpack.c.b16 %v680, %v676
    %v805 = vpack.c.b16 %v681, %v677
    %v806 = vpack.c.b16 %v686, %v682
    %v807 = vpack.c.b16 %v687, %v683
    %v808 = vpack.c.b16 %v688, %v684
    %v809 = vpack.c.b16 %v689, %v685
    %v810 = vpack.c.b16 %v694, %v690
    %v811 = vpack.c.b16 %v695, %v691
    %v812 = vpack.c.b16 %v696, %v692
    %v813 = vpack.c.b16 %v697, %v693
    %v814 = vpack.c.b16 %v702, %v698
    %v815 = vpack.c.b16 %v703, %v699
    %v816 = vpack.c.b16 %v704, %v700
    %v817 = vpack.c.b16 %v705, %v701
    %v818 = vpack.c.b16 %v710, %v706
    %v819 = vpack.c.b16 %v711, %v707
    %v820 = vpack.c.b16 %v712, %v708
    %v821 = vpack.c.b16 %v713, %v709
    %v822 = vpack.c.b16 %v718, %v714
    %v823 = vpack.c.b16 %v719, %v715
    %v824 = vpack.c.b16 %v720, %v716
    %v825 = vpack.c.b16 %v721, %v717
    %v826 = vpack.c.b16 %v726, %v722
    %v827 = vpack.c.b16 %v727, %v723
    %v828 = vpack.c.b16 %v728, %v724
    %v829 = vpack.c.b16 %v729, %v725
    %v830 = vpack.c.b16 %v734, %v730
    %v831 = vpack.c.b16 %v735, %v731
    %v832 = vpack.c.b16 %v736, %v732
    %v833 = vpack.c.b16 %v737, %v733
    %930 = vmatpush.bf16.msra.mxu0 %v766
    %931 = vmatpush.bf16.msra.mxu0 %v762
    %932 = vmatpush.bf16.msra.mxu0 %v758
    %933 = vmatpush.bf16.msra.mxu0 %v754
    %934 = vmatpush.bf16.msra.mxu0 %v750
    %935 = vmatpush.bf16.msra.mxu0 %v746
    %936 = vmatpush.bf16.msra.mxu0 %v742
    %937 = vmatpush.bf16.msra.mxu0 %v738
    %938 = vmatmul.bf16.gmra.mxu0 %v341
    %v939 = vpop.f32.mrf.mxu0
    %v940 = vadd.f32 %v442, %v939
    %v941 = vpop.f32.mrf.mxu0
    %v942 = vadd.f32 %v442, %v941
    %943 = vdwg.mxu0
    %944 = vmatpush.bf16.msra.mxu0 %v798
    %945 = vmatpush.bf16.msra.mxu0 %v794
    %946 = vmatpush.bf16.msra.mxu0 %v790
    %947 = vmatpush.bf16.msra.mxu0 %v786
    %948 = vmatpush.bf16.msra.mxu0 %v782
    %949 = vmatpush.bf16.msra.mxu0 %v778
    %950 = vmatpush.bf16.msra.mxu0 %v774
    %951 = vmatpush.bf16.msra.mxu0 %v770
    %952 = vmatmul.bf16.gmra.mxu0 %v342
    %v953 = vpop.f32.mrf.mxu0
    %v954 = vadd.f32 %v940, %v953
    %v955 = vpop.f32.mrf.mxu0
    %v956 = vadd.f32 %v942, %v955
    %957 = vdwg.mxu0
    %958 = vmatpush.bf16.msra.mxu0 %v830
    %959 = vmatpush.bf16.msra.mxu0 %v826
    %960 = vmatpush.bf16.msra.mxu0 %v822
    %961 = vmatpush.bf16.msra.mxu0 %v818
    %962 = vmatpush.bf16.msra.mxu0 %v814
    %963 = vmatpush.bf16.msra.mxu0 %v810
    %964 = vmatpush.bf16.msra.mxu0 %v806
    %965 = vmatpush.bf16.msra.mxu0 %v802
    %966 = vmatmul.bf16.gmra.mxu0 %v343
    %v967 = vpop.f32.mrf.mxu0
    %v968 = vadd.f32 %v954, %v967
    %v969 = vpop.f32.mrf.mxu0
    %v970 = vadd.f32 %v956, %v969
    %971 = vdwg.mxu0
    %972 = vmatpush.bf16.msra.mxu0 %v767
    %973 = vmatpush.bf16.msra.mxu0 %v763
    %974 = vmatpush.bf16.msra.mxu0 %v759
    %975 = vmatpush.bf16.msra.mxu0 %v755
    %976 = vmatpush.bf16.msra.mxu0 %v751
    %977 = vmatpush.bf16.msra.mxu0 %v747
    %978 = vmatpush.bf16.msra.mxu0 %v743
    %979 = vmatpush.bf16.msra.mxu0 %v739
    %980 = vmatmul.bf16.gmra.mxu0 %v341
    %v981 = vpop.f32.mrf.mxu0
    %v982 = vadd.f32 %v443, %v981
    %v983 = vpop.f32.mrf.mxu0
    %v984 = vadd.f32 %v443, %v983
    %985 = vdwg.mxu0
    %986 = vmatpush.bf16.msra.mxu0 %v799
    %987 = vmatpush.bf16.msra.mxu0 %v795
    %988 = vmatpush.bf16.msra.mxu0 %v791
    %989 = vmatpush.bf16.msra.mxu0 %v787
    %990 = vmatpush.bf16.msra.mxu0 %v783
    %991 = vmatpush.bf16.msra.mxu0 %v779
    %992 = vmatpush.bf16.msra.mxu0 %v775
    %993 = vmatpush.bf16.msra.mxu0 %v771
    %994 = vmatmul.bf16.gmra.mxu0 %v342
    %v995 = vpop.f32.mrf.mxu0
    %v996 = vadd.f32 %v982, %v995
    %v997 = vpop.f32.mrf.mxu0
    %v998 = vadd.f32 %v984, %v997
    %999 = vdwg.mxu0
    %1000 = vmatpush.bf16.msra.mxu0 %v831
    %1001 = vmatpush.bf16.msra.mxu0 %v827
    %1002 = vmatpush.bf16.msra.mxu0 %v823
    %1003 = vmatpush.bf16.msra.mxu0 %v819
    %1004 = vmatpush.bf16.msra.mxu0 %v815
    %1005 = vmatpush.bf16.msra.mxu0 %v811
    %1006 = vmatpush.bf16.msra.mxu0 %v807
    %1007 = vmatpush.bf16.msra.mxu0 %v803
    %1008 = vmatmul.bf16.gmra.mxu0 %v343
    %v1009 = vpop.f32.mrf.mxu0
    %v1010 = vadd.f32 %v996, %v1009
    %v1011 = vpop.f32.mrf.mxu0
    %v1012 = vadd.f32 %v998, %v1011
    %1013 = vdwg.mxu0
    %1014 = vmatpush.bf16.msra.mxu0 %v768
    %1015 = vmatpush.bf16.msra.mxu0 %v764
    %1016 = vmatpush.bf16.msra.mxu0 %v760
    %1017 = vmatpush.bf16.msra.mxu0 %v756
    %1018 = vmatpush.bf16.msra.mxu0 %v752
    %1019 = vmatpush.bf16.msra.mxu0 %v748
    %1020 = vmatpush.bf16.msra.mxu0 %v744
    %1021 = vmatpush.bf16.msra.mxu0 %v740
    %1022 = vmatmul.bf16.gmra.mxu0 %v341
    %v1023 = vpop.f32.mrf.mxu0
    %v1024 = vadd.f32 %v444, %v1023
    %v1025 = vpop.f32.mrf.mxu0
    %v1026 = vadd.f32 %v444, %v1025
    %1027 = vdwg.mxu0
    %1028 = vmatpush.bf16.msra.mxu0 %v800
    %1029 = vmatpush.bf16.msra.mxu0 %v796
    %1030 = vmatpush.bf16.msra.mxu0 %v792
    %1031 = vmatpush.bf16.msra.mxu0 %v788
    %1032 = vmatpush.bf16.msra.mxu0 %v784
    %1033 = vmatpush.bf16.msra.mxu0 %v780
    %1034 = vmatpush.bf16.msra.mxu0 %v776
    %1035 = vmatpush.bf16.msra.mxu0 %v772
    %1036 = vmatmul.bf16.gmra.mxu0 %v342
    %v1037 = vpop.f32.mrf.mxu0
    %v1038 = vadd.f32 %v1024, %v1037
    %v1039 = vpop.f32.mrf.mxu0
    %v1040 = vadd.f32 %v1026, %v1039
    %1041 = vdwg.mxu0
    %1042 = vmatpush.bf16.msra.mxu0 %v832
    %1043 = vmatpush.bf16.msra.mxu0 %v828
    %1044 = vmatpush.bf16.msra.mxu0 %v824
    %1045 = vmatpush.bf16.msra.mxu0 %v820
    %1046 = vmatpush.bf16.msra.mxu0 %v816
    %1047 = vmatpush.bf16.msra.mxu0 %v812
    %1048 = vmatpush.bf16.msra.mxu0 %v808
    %1049 = vmatpush.bf16.msra.mxu0 %v804
    %1050 = vmatmul.bf16.gmra.mxu0 %v343
    %v1051 = vpop.f32.mrf.mxu0
    %v1052 = vadd.f32 %v1038, %v1051
    %v1053 = vpop.f32.mrf.mxu0
    %v1054 = vadd.f32 %v1040, %v1053
    %1055 = vdwg.mxu0
    %1056 = vmatpush.bf16.msra.mxu0 %v769
    %1057 = vmatpush.bf16.msra.mxu0 %v765
    %1058 = vmatpush.bf16.msra.mxu0 %v761
    %1059 = vmatpush.bf16.msra.mxu0 %v757
    %1060 = vmatpush.bf16.msra.mxu0 %v753
    %1061 = vmatpush.bf16.msra.mxu0 %v749
    %1062 = vmatpush.bf16.msra.mxu0 %v745
    %1063 = vmatpush.bf16.msra.mxu0 %v741
    %1064 = vmatmul.bf16.gmra.mxu0 %v341
    %v1065 = vpop.f32.mrf.mxu0
    %v1066 = vadd.f32 %v445, %v1065
    %v1067 = vpop.f32.mrf.mxu0
    %v1068 = vadd.f32 %v445, %v1067
    %1069 = vdwg.mxu0
    %1070 = vmatpush.bf16.msra.mxu0 %v801
    %1071 = vmatpush.bf16.msra.mxu0 %v797
    %1072 = vmatpush.bf16.msra.mxu0 %v793
    %1073 = vmatpush.bf16.msra.mxu0 %v789
    %1074 = vmatpush.bf16.msra.mxu0 %v785
    %1075 = vmatpush.bf16.msra.mxu0 %v781
    %1076 = vmatpush.bf16.msra.mxu0 %v777
    %1077 = vmatpush.bf16.msra.mxu0 %v773
    %1078 = vmatmul.bf16.gmra.mxu0 %v342
    %v1079 = vpop.f32.mrf.mxu0
    %v1080 = vadd.f32 %v1066, %v1079
    %v1081 = vpop.f32.mrf.mxu0
    %v1082 = vadd.f32 %v1068, %v1081
    %1083 = vdwg.mxu0
    %1084 = vmatpush.bf16.msra.mxu0 %v833
    %1085 = vmatpush.bf16.msra.mxu0 %v829
    %1086 = vmatpush.bf16.msra.mxu0 %v825
    %1087 = vmatpush.bf16.msra.mxu0 %v821
    %1088 = vmatpush.bf16.msra.mxu0 %v817
    %1089 = vmatpush.bf16.msra.mxu0 %v813
    %1090 = vmatpush.bf16.msra.mxu0 %v809
    %1091 = vmatpush.bf16.msra.mxu0 %v805
    %1092 = vmatmul.bf16.gmra.mxu0 %v343
    %v1093 = vpop.f32.mrf.mxu0
    %v1094 = vadd.f32 %v1080, %v1093
    %v1095 = vpop.f32.mrf.mxu0
    %v1096 = vadd.f32 %v1082, %v1095
    %1097 = vdwg.mxu0
    %v1098 = vtanh.pop %v968
    %v1099 = vtanh.pop %v1010
    %v1100 = vtanh.pop %v1052
    %v1101 = vtanh.pop %v1094
    %v1102 = vtanh.pop %v970
    %v1103 = vtanh.pop %v1012
    %v1104 = vtanh.pop %v1054
    %v1105 = vtanh.pop %v1096
    %v1106 = vpack.c.bf16 %v1102, %v1098
    %v1107 = vpack.c.bf16 %v1103, %v1099
    %v1108 = vpack.c.bf16 %v1104, %v1100
    %v1109 = vpack.c.bf16 %v1105, %v1101
    %v1110 = vld [vmem:[#allocation11] sm:$0xf]
    %v1111 = vld [vmem:[#allocation11 + $0x4] sm:$0xf]
    %v1112 = vld [vmem:[#allocation11 + $0x8] sm:$0xf]
    %v1113 = vld [vmem:[#allocation11 + $0xc] sm:$0xf]
    %v1114 = vld [vmem:[#allocation11 + $0x10] sm:$0xf]
    %v1115 = vld [vmem:[#allocation11 + $0x14] sm:$0xf]
    %v1116 = vld [vmem:[#allocation11 + $0x18] sm:$0xf]
    %v1117 = vld [vmem:[#allocation11 + $0x1c] sm:$0xf]
    %v1118 = vld [vmem:[#allocation11 + $0x20] sm:$0xf]
    %v1119 = vld [vmem:[#allocation11 + $0x24] sm:$0xf]
    %v1120 = vld [vmem:[#allocation11 + $0x28] sm:$0xf]
    %v1121 = vld [vmem:[#allocation11 + $0x2c] sm:$0xf]
    %v1122 = vld [vmem:[#allocation11 + $0x30] sm:$0xf]
    %v1123 = vld [vmem:[#allocation11 + $0x34] sm:$0xf]
    %v1124 = vld [vmem:[#allocation11 + $0x38] sm:$0xf]
    %v1125 = vld [vmem:[#allocation11 + $0x3c] sm:$0xf]
    %v1126 = vld [vmem:[#allocation11 + $0x40] sm:$0xf]
    %v1127 = vld [vmem:[#allocation11 + $0x44] sm:$0xf]
    %v1128 = vld [vmem:[#allocation11 + $0x48] sm:$0xf]
    %v1129 = vld [vmem:[#allocation11 + $0x4c] sm:$0xf]
    %v1130 = vld [vmem:[#allocation11 + $0x50] sm:$0xf]
    %v1131 = vld [vmem:[#allocation11 + $0x54] sm:$0xf]
    %v1132 = vld [vmem:[#allocation11 + $0x58] sm:$0xf]
    %v1133 = vld [vmem:[#allocation11 + $0x5c] sm:$0xf]
    %v1134 = vld [vmem:[#allocation11 + $0x60] sm:$0xf]
    %v1135 = vld [vmem:[#allocation11 + $0x64] sm:$0xf]
    %v1136 = vld [vmem:[#allocation11 + $0x68] sm:$0xf]
    %v1137 = vld [vmem:[#allocation11 + $0x6c] sm:$0xf]
    %v1138 = vld [vmem:[#allocation11 + $0x70] sm:$0xf]
    %v1139 = vld [vmem:[#allocation11 + $0x74] sm:$0xf]
    %v1140 = vld [vmem:[#allocation11 + $0x78] sm:$0xf]
    %v1141 = vld [vmem:[#allocation11 + $0x7c] sm:$0xf]
    %v1142 = vld [vmem:[#allocation11 + $0x80] sm:$0xf]
    %v1143 = vld [vmem:[#allocation11 + $0x84] sm:$0xf]
    %v1144 = vld [vmem:[#allocation11 + $0x88] sm:$0xf]
    %v1145 = vld [vmem:[#allocation11 + $0x8c] sm:$0xf]
    %v1146 = vld [vmem:[#allocation11 + $0x90] sm:$0xf]
    %v1147 = vld [vmem:[#allocation11 + $0x94] sm:$0xf]
    %v1148 = vld [vmem:[#allocation11 + $0x98] sm:$0xf]
    %v1149 = vld [vmem:[#allocation11 + $0x9c] sm:$0xf]
    %v1150 = vld [vmem:[#allocation11 + $0xa0] sm:$0xf]
    %v1151 = vld [vmem:[#allocation11 + $0xa4] sm:$0xf]
    %v1152 = vld [vmem:[#allocation11 + $0xa8] sm:$0xf]
    %v1153 = vld [vmem:[#allocation11 + $0xac] sm:$0xf]
    %v1154 = vld [vmem:[#allocation11 + $0xb0] sm:$0xf]
    %v1155 = vld [vmem:[#allocation11 + $0xb4] sm:$0xf]
    %v1156 = vld [vmem:[#allocation11 + $0xb8] sm:$0xf]
    %v1157 = vld [vmem:[#allocation11 + $0xbc] sm:$0xf]
    %v1158 = vld [vmem:[#allocation11 + $0xc0] sm:$0xf]
    %v1159 = vld [vmem:[#allocation11 + $0xc4] sm:$0xf]
    %v1160 = vld [vmem:[#allocation11 + $0xc8] sm:$0xf]
    %v1161 = vld [vmem:[#allocation11 + $0xcc] sm:$0xf]
    %v1162 = vld [vmem:[#allocation11 + $0xd0] sm:$0xf]
    %v1163 = vld [vmem:[#allocation11 + $0xd4] sm:$0xf]
    %v1164 = vld [vmem:[#allocation11 + $0xd8] sm:$0xf]
    %v1165 = vld [vmem:[#allocation11 + $0xdc] sm:$0xf]
    %v1166 = vld [vmem:[#allocation11 + $0xe0] sm:$0xf]
    %v1167 = vld [vmem:[#allocation11 + $0xe4] sm:$0xf]
    %v1168 = vld [vmem:[#allocation11 + $0xe8] sm:$0xf]
    %v1169 = vld [vmem:[#allocation11 + $0xec] sm:$0xf]
    %v1170 = vld [vmem:[#allocation11 + $0xf0] sm:$0xf]
    %v1171 = vld [vmem:[#allocation11 + $0xf4] sm:$0xf]
    %v1172 = vld [vmem:[#allocation11 + $0xf8] sm:$0xf]
    %v1173 = vld [vmem:[#allocation11 + $0xfc] sm:$0xf]
    %v1174 = vld [vmem:[%s6] sm:$0x1]
    %v1176 = vperm.slane %v1174, 0
    %v1242 = vunpack.c.l.b16 %v1110
    %v1243 = vunpack.c.l.b16 %v1111
    %v1244 = vunpack.c.l.b16 %v1112
    %v1245 = vunpack.c.l.b16 %v1113
    %v1246 = vunpack.c.l.b16 %v1114
    %v1247 = vunpack.c.l.b16 %v1115
    %v1248 = vunpack.c.l.b16 %v1116
    %v1249 = vunpack.c.l.b16 %v1117
    %v1250 = vunpack.c.l.b16 %v1118
    %v1251 = vunpack.c.l.b16 %v1119
    %v1252 = vunpack.c.l.b16 %v1120
    %v1253 = vunpack.c.l.b16 %v1121
    %v1254 = vunpack.c.l.b16 %v1122
    %v1255 = vunpack.c.l.b16 %v1123
    %v1256 = vunpack.c.l.b16 %v1124
    %v1257 = vunpack.c.l.b16 %v1125
    %v1258 = vunpack.c.l.b16 %v1126
    %v1259 = vunpack.c.l.b16 %v1127
    %v1260 = vunpack.c.l.b16 %v1128
    %v1261 = vunpack.c.l.b16 %v1129
    %v1262 = vunpack.c.l.b16 %v1130
    %v1263 = vunpack.c.l.b16 %v1131
    %v1264 = vunpack.c.l.b16 %v1132
    %v1265 = vunpack.c.l.b16 %v1133
    %v1266 = vunpack.c.l.b16 %v1134
    %v1267 = vunpack.c.l.b16 %v1135
    %v1268 = vunpack.c.l.b16 %v1136
    %v1269 = vunpack.c.l.b16 %v1137
    %v1270 = vunpack.c.l.b16 %v1138
    %v1271 = vunpack.c.l.b16 %v1139
    %v1272 = vunpack.c.l.b16 %v1140
    %v1273 = vunpack.c.l.b16 %v1141
    %v1274 = vunpack.c.l.b16 %v1142
    %v1275 = vunpack.c.l.b16 %v1143
    %v1276 = vunpack.c.l.b16 %v1144
    %v1277 = vunpack.c.l.b16 %v1145
    %v1278 = vunpack.c.l.b16 %v1146
    %v1279 = vunpack.c.l.b16 %v1147
    %v1280 = vunpack.c.l.b16 %v1148
    %v1281 = vunpack.c.l.b16 %v1149
    %v1282 = vunpack.c.l.b16 %v1150
    %v1283 = vunpack.c.l.b16 %v1151
    %v1284 = vunpack.c.l.b16 %v1152
    %v1285 = vunpack.c.l.b16 %v1153
    %v1286 = vunpack.c.l.b16 %v1154
    %v1287 = vunpack.c.l.b16 %v1155
    %v1288 = vunpack.c.l.b16 %v1156
    %v1289 = vunpack.c.l.b16 %v1157
    %v1290 = vunpack.c.l.b16 %v1158
    %v1291 = vunpack.c.l.b16 %v1159
    %v1292 = vunpack.c.l.b16 %v1160
    %v1293 = vunpack.c.l.b16 %v1161
    %v1294 = vunpack.c.l.b16 %v1162
    %v1295 = vunpack.c.l.b16 %v1163
    %v1296 = vunpack.c.l.b16 %v1164
    %v1297 = vunpack.c.l.b16 %v1165
    %v1298 = vunpack.c.l.b16 %v1166
    %v1299 = vunpack.c.l.b16 %v1167
    %v1300 = vunpack.c.l.b16 %v1168
    %v1301 = vunpack.c.l.b16 %v1169
    %v1302 = vunpack.c.l.b16 %v1170
    %v1303 = vunpack.c.l.b16 %v1171
    %v1304 = vunpack.c.l.b16 %v1172
    %v1305 = vunpack.c.l.b16 %v1173
    %v1306 = vpack.c.b16 %v1243, %v1242
    %v1307 = vpack.c.b16 %v1245, %v1244
    %v1308 = vpack.c.b16 %v1247, %v1246
    %v1309 = vpack.c.b16 %v1249, %v1248
    %v1310 = vpack.c.b16 %v1251, %v1250
    %v1311 = vpack.c.b16 %v1253, %v1252
    %v1312 = vpack.c.b16 %v1255, %v1254
    %v1313 = vpack.c.b16 %v1257, %v1256
    %v1314 = vpack.c.b16 %v1259, %v1258
    %v1315 = vpack.c.b16 %v1261, %v1260
    %v1316 = vpack.c.b16 %v1263, %v1262
    %v1317 = vpack.c.b16 %v1265, %v1264
    %v1318 = vpack.c.b16 %v1267, %v1266
    %v1319 = vpack.c.b16 %v1269, %v1268
    %v1320 = vpack.c.b16 %v1271, %v1270
    %v1321 = vpack.c.b16 %v1273, %v1272
    %v1322 = vpack.c.b16 %v1275, %v1274
    %v1323 = vpack.c.b16 %v1277, %v1276
    %v1324 = vpack.c.b16 %v1279, %v1278
    %v1325 = vpack.c.b16 %v1281, %v1280
    %v1326 = vpack.c.b16 %v1283, %v1282
    %v1327 = vpack.c.b16 %v1285, %v1284
    %v1328 = vpack.c.b16 %v1287, %v1286
    %v1329 = vpack.c.b16 %v1289, %v1288
    %v1330 = vpack.c.b16 %v1291, %v1290
    %v1331 = vpack.c.b16 %v1293, %v1292
    %v1332 = vpack.c.b16 %v1295, %v1294
    %v1333 = vpack.c.b16 %v1297, %v1296
    %v1334 = vpack.c.b16 %v1299, %v1298
    %v1335 = vpack.c.b16 %v1301, %v1300
    %v1336 = vpack.c.b16 %v1303, %v1302
    %v1337 = vpack.c.b16 %v1305, %v1304
    %1370 = vmatpush.bf16.msra.mxu0 %v1313
    %1371 = vmatpush.bf16.msra.mxu0 %v1312
    %1372 = vmatpush.bf16.msra.mxu0 %v1311
    %1373 = vmatpush.bf16.msra.mxu0 %v1310
    %1374 = vmatpush.bf16.msra.mxu0 %v1309
    %1375 = vmatpush.bf16.msra.mxu0 %v1308
    %1376 = vmatpush.bf16.msra.mxu0 %v1307
    %1377 = vmatpush.bf16.msra.mxu0 %v1306
    %1378 = vmatmul.bf16.gmra.mxu0 %v1106
    %v1379 = vpop.f32.mrf.mxu0
    %v1380 = vadd.f32 %v1176, %v1379
    %v1381 = vpop.f32.mrf.mxu0
    %v1382 = vadd.f32 %v1176, %v1381
    %1383 = vdwg.mxu0
    %1384 = vmatpush.bf16.msra.mxu0 %v1321
    %1385 = vmatpush.bf16.msra.mxu0 %v1320
    %1386 = vmatpush.bf16.msra.mxu0 %v1319
    %1387 = vmatpush.bf16.msra.mxu0 %v1318
    %1388 = vmatpush.bf16.msra.mxu0 %v1317
    %1389 = vmatpush.bf16.msra.mxu0 %v1316
    %1390 = vmatpush.bf16.msra.mxu0 %v1315
    %1391 = vmatpush.bf16.msra.mxu0 %v1314
    %1392 = vmatmul.bf16.gmra.mxu0 %v1107
    %v1393 = vpop.f32.mrf.mxu0
    %v1394 = vadd.f32 %v1380, %v1393
    %v1395 = vpop.f32.mrf.mxu0
    %v1396 = vadd.f32 %v1382, %v1395
    %1397 = vdwg.mxu0
    %1398 = vmatpush.bf16.msra.mxu0 %v1329
    %1399 = vmatpush.bf16.msra.mxu0 %v1328
    %1400 = vmatpush.bf16.msra.mxu0 %v1327
    %1401 = vmatpush.bf16.msra.mxu0 %v1326
    %1402 = vmatpush.bf16.msra.mxu0 %v1325
    %1403 = vmatpush.bf16.msra.mxu0 %v1324
    %1404 = vmatpush.bf16.msra.mxu0 %v1323
    %1405 = vmatpush.bf16.msra.mxu0 %v1322
    %1406 = vmatmul.bf16.gmra.mxu0 %v1108
    %v1407 = vpop.f32.mrf.mxu0
    %v1408 = vadd.f32 %v1394, %v1407
    %v1409 = vpop.f32.mrf.mxu0
    %v1410 = vadd.f32 %v1396, %v1409
    %1411 = vdwg.mxu0
    %1412 = vmatpush.bf16.msra.mxu0 %v1337
    %1413 = vmatpush.bf16.msra.mxu0 %v1336
    %1414 = vmatpush.bf16.msra.mxu0 %v1335
    %1415 = vmatpush.bf16.msra.mxu0 %v1334
    %1416 = vmatpush.bf16.msra.mxu0 %v1333
    %1417 = vmatpush.bf16.msra.mxu0 %v1332
    %1418 = vmatpush.bf16.msra.mxu0 %v1331
    %1419 = vmatpush.bf16.msra.mxu0 %v1330
    %1420 = vmatmul.bf16.gmra.mxu0 %v1109
    %v1421 = vpop.f32.mrf.mxu0
    %v1422 = vadd.f32 %v1408, %v1421
    %v1423 = vpop.f32.mrf.mxu0
    %v1424 = vadd.f32 %v1410, %v1423
    %1425 = vdwg.mxu0
    %1426 = vst [vmem:[#allocation13] sm:$0xff] %v1422
    %1427 = vst [vmem:[#allocation13 + $0x8] sm:$0xff] %v1424
    // Predicated region
    $region54: #{tpu_custom_call.1} parent=1 // pred_check
      _
    $region55: #{tpu_custom_call.1} parent=1 // pred_check_branch
      %1429 = sbr.rel (0) target = $region57
    $region56: #{tpu_custom_call.1} parent=1 // pred_region
      %1431 = vsyncadd [#allocation4], 0
      %s1432 = sshll.u32 [#allocation13], 4
      %s1433 = int_to_ptr.vmem [resolvable:$true] %s1432
      %s1434 = sshll.u32 %s7, 4
      %s1435 = int_to_ptr.hbm [resolvable:$true] %s1434
      %1440 = dma.vmem_to_hbm [thread:$0]  %s1433, 256, %s1435, [#allocation4], 128, 128, 8
    $region57: #{tpu_custom_call.1} parent=1 // pred_fallthru
      _
    // Predicated region
    $region58: #{tpu_custom_call.1} parent=1 // pred_check
      _
    $region59: #{tpu_custom_call.1} parent=1 // pred_check_branch
      %1442 = sbr.rel (0) target = $region61
    $region60: #{tpu_custom_call.1} parent=1 // pred_region
      %1444 = dma.done [#allocation4], 256
    $region61: #{tpu_custom_call.1} parent=1 // pred_fallthru
      _
    %1445 = vsyncpa [#allocation3], 1
    %1446 = vsyncpa [#allocation6], 1
    %1447 = vsyncpa [#allocation9], 1
    %1448 = vsyncpa [#allocation12], 1
    %1449 = vsyncpa [#allocation4], 1

</llo_original>
